<compile_context>
chip_gen: v5e
topology: v5e:2x2
jax: 0.10.0
libtpu: 0.0.40
codegen_flags: <defaults>
</compile_context>

<pallas_src>
import math

import jax
import jax.numpy as jnp
import numpy as np
from jax.experimental import pallas as pl
from jax.experimental.pallas import tpu as pltpu

INPUT_SIZE = 64
N_HIDDEN = 100          # "n": must satisfy the 240-feature constraint of linear_3
OUTPUT_SIZE = 16

K1, S1, P1 = 20, 4, 5   # conv1d_1: kernel, stride, padding
K2, S2, P2 = 5, 2, 2    # conv1d_2
C1 = 20                 # conv channels
L1 = (N_HIDDEN + 2 * P1 - K1) // S1 + 1      # 23
L2 = (L1 + 2 * P2 - K2) // S2 + 1            # 12
assert C1 * L2 == 240, (L1, L2)

LN_EPS = 1e-5
TWO_PI = 2.0 * math.pi

# ---- lane-padded feature dims (multiples of 128) -------------------------
IN_PAD = 128            # 64  -> 128
N_PAD = 128             # 100 -> 128
A1 = C1 * L1            # 460
A1_PAD = 512            # 460 -> 512
A2 = C1 * L2            # 240
A2_PAD = 256            # 240 -> 256
OUT_PAD = 128           # 16  -> 128
MF_COLS = A1_PAD + OUT_PAD   # 640: fused [M1 | W01^T]

# ---- packed bias/scale vector layout (128-aligned segments) --------------
OFF_G1 = 0
OFF_BE1 = IN_PAD
OFF_B1 = 2 * IN_PAD
OFF_BF = OFF_B1 + N_PAD          # 384, width MF_COLS (bc1 tiled | b01)
OFF_BC2 = OFF_BF + MF_COLS       # 1024, width A2_PAD
OFF_B3 = OFF_BC2 + A2_PAD        # 1280, width OUT_PAD
VEC_LEN = OFF_B3 + OUT_PAD       # 1408

B_TILE = 8   # rows per grid step; raise to 128 (v5e) / 256 (v7x) for large batches


def network0_kernel(x_ref, vecs_ref, w1_ref, mf_ref, m2_ref, w3_ref, out_ref):
    f32 = jnp.float32
    bf16 = jnp.bfloat16

    x = x_ref[...]                                            # (Bt, 128); lanes 64.. are 0
    # LayerNorm over the true 64 features: two *independent* lane reductions
    # (E[x], E[x^2]) that can pipeline; padded zero lanes don't affect sums.
    s1 = jnp.sum(x, axis=-1, keepdims=True)
    s2 = jnp.sum(x * x, axis=-1, keepdims=True)
    mu = s1 * (1.0 / INPUT_SIZE)
    var = s2 * (1.0 / INPUT_SIZE) - mu * mu
    g1 = vecs_ref[:, OFF_G1:OFF_G1 + IN_PAD]                  # zero-padded -> xn pad lanes stay 0
    be1 = vecs_ref[:, OFF_BE1:OFF_BE1 + IN_PAD]
    xn = (x - mu) * jax.lax.rsqrt(var + LN_EPS) * g1 + be1

    # linear_1 (LeakyReLU(slope=1) == identity): (Bt,128)@(128,128)
    b1 = vecs_ref[:, OFF_B1:OFF_B1 + N_PAD]
    h1 = jnp.dot(xn.astype(bf16), w1_ref[...],
                 preferred_element_type=f32) + b1             # (Bt, 128)

    # Fused [conv1d_1-as-matmul | linear_01]: one (Bt,128)@(128,640) dot,
    # sliced at the 512-lane boundary (no lane rotates).
    bfu = vecs_ref[:, OFF_BF:OFF_BF + MF_COLS]
    f = jnp.dot(h1.astype(bf16), mf_ref[...],
                preferred_element_type=f32) + bfu              # (Bt, 640)
    # Pad lanes 460:512 of a1 end up sigmoid(0)=0.5, but m2's pad rows are
    # zero so they are mathematically inert (same for a2 pads vs w3 pads).
    a1 = jax.nn.sigmoid(f[:, :A1_PAD])                         # (Bt, 512) conv1 + sigmoid
    x0 = f[:, A1_PAD:]                                         # (Bt, 128) linear_01 (identity act)

    # conv1d_2 as matmul + sigmoid: (Bt,512)@(512,256)
    bc2 = vecs_ref[:, OFF_BC2:OFF_BC2 + A2_PAD]
    a2 = jax.nn.sigmoid(
        jnp.dot(a1.astype(bf16), m2_ref[...], preferred_element_type=f32) + bc2)

    # linear_3 + residual x_0, sigmoid, * 2*pi: (Bt,256)@(256,128)
    b3 = vecs_ref[:, OFF_B3:OFF_B3 + OUT_PAD]
    y = jnp.dot(a2.astype(bf16), w3_ref[...],
                preferred_element_type=f32) + b3 + x0
    out_ref[...] = jax.nn.sigmoid(y) * TWO_PI


def init_params(key):
    ks = jax.random.split(key, 12)
    p = {}
    p["W1"] = 0.1 * jax.random.normal(ks[0], (N_HIDDEN, INPUT_SIZE), jnp.float32)
    p["b1"] = 0.1 * jax.random.normal(ks[1], (N_HIDDEN,), jnp.float32)
    p["W01"] = 0.1 * jax.random.normal(ks[2], (OUTPUT_SIZE, N_HIDDEN), jnp.float32)
    p["b01"] = 0.1 * jax.random.normal(ks[3], (OUTPUT_SIZE,), jnp.float32)
    p["Wc1"] = 0.2 * jax.random.normal(ks[4], (C1, 1, K1), jnp.float32)     # (O, I, K)
    p["bc1"] = 0.1 * jax.random.normal(ks[5], (C1,), jnp.float32)
    p["Wc2"] = 0.2 * jax.random.normal(ks[6], (C1, C1, K2), jnp.float32)    # (O, I, K)
    p["bc2"] = 0.1 * jax.random.normal(ks[7], (C1,), jnp.float32)
    p["W3"] = 0.1 * jax.random.normal(ks[8], (OUTPUT_SIZE, C1 * L2), jnp.float32)
    p["b3"] = 0.1 * jax.random.normal(ks[9], (OUTPUT_SIZE,), jnp.float32)
    p["g1"] = 1.0 + 0.1 * jax.random.normal(ks[10], (INPUT_SIZE,), jnp.float32)
    p["be1"] = 0.1 * jax.random.normal(ks[11], (INPUT_SIZE,), jnp.float32)
    return p


def prepare_params(p):
    """One-time host-side (numpy) weight prep: tap-unroll convs, pad to lane
    multiples, fuse conv1+linear_01, pack biases, cast weights to bf16."""
    q = {k: np.asarray(v) for k, v in p.items()}

    # M1: (100, 460). Column 20*i + c holds conv1's tap for output position i,
    # channel c: M1[g, 20*i + c] = Wc1[c, 0, t] with g = S1*i + t - P1.
    wc1 = q["Wc1"][:, 0, :]                                   # (C1, K1) [c, t]
    m1 = np.zeros((N_HIDDEN, A1), np.float32)
    for i in range(L1):
        for t in range(K1):
            g = S1 * i + t - P1
            if 0 <= g < N_HIDDEN:
                m1[g, C1 * i:C1 * (i + 1)] = wc1[:, t]

    # M2: (460, 240). Row 20*i + cin, column 20*j + cout:
    # M2[20*i+cin, 20*j+cout] = Wc2[cout, cin, t] with i = S2*j + t - P2.
    m2 = np.zeros((A1, A2), np.float32)
    for j in range(L2):
        for t in range(K2):
            i = S2 * j + t - P2
            if 0 <= i < L1:
                m2[C1 * i:C1 * (i + 1), C1 * j:C1 * (j + 1)] = q["Wc2"][:, :, t].T

    # W1^T, padded (64,100) -> (128,128)
    w1t = np.zeros((IN_PAD, N_PAD), np.float32)
    w1t[:INPUT_SIZE, :N_HIDDEN] = q["W1"].T

    # Fused [M1 | W01^T] padded to (128, 640); W01^T starts at lane 512.
    mf = np.zeros((N_PAD, MF_COLS), np.float32)
    mf[:N_HIDDEN, :A1] = m1
    mf[:N_HIDDEN, A1_PAD:A1_PAD + OUTPUT_SIZE] = q["W01"].T

    m2p = np.zeros((A1_PAD, A2_PAD), np.float32)
    m2p[:A1, :A2] = m2

    # W3 permuted channel-major -> position-major (matches a2's 20*j+c order),
    # then padded (240,16) -> (256,128).
    w3p = q["W3"].reshape(OUTPUT_SIZE, C1, L2).transpose(2, 1, 0).reshape(A2, OUTPUT_SIZE)
    w3pp = np.zeros((A2_PAD, OUT_PAD), np.float32)
    w3pp[:A2, :OUTPUT_SIZE] = w3p

    # Packed bias/scale vector: one (1, 1408) f32 array, 128-aligned segments.
    vecs = np.zeros((1, VEC_LEN), np.float32)
    vecs[0, OFF_G1:OFF_G1 + INPUT_SIZE] = q["g1"]
    vecs[0, OFF_BE1:OFF_BE1 + INPUT_SIZE] = q["be1"]
    vecs[0, OFF_B1:OFF_B1 + N_HIDDEN] = q["b1"]
    vecs[0, OFF_BF:OFF_BF + A1] = np.tile(q["bc1"], L1)         # flat[20*i+c] -> bc1[c]
    vecs[0, OFF_BF + A1_PAD:OFF_BF + A1_PAD + OUTPUT_SIZE] = q["b01"]
    vecs[0, OFF_BC2:OFF_BC2 + A2] = np.tile(q["bc2"], L2)
    vecs[0, OFF_B3:OFF_B3 + OUTPUT_SIZE] = q["b3"]

    return {
        "w1": jnp.asarray(w1t, jnp.bfloat16),
        "mf": jnp.asarray(mf, jnp.bfloat16),
        "m2": jnp.asarray(m2p, jnp.bfloat16),
        "w3": jnp.asarray(w3pp, jnp.bfloat16),
        "vecs": jnp.asarray(vecs, jnp.float32),
    }


def network0_pallas_batch(xb, prep):
    """Batched forward: xb (B, 64) -> (B, 16), each row processed independently
    with the exact single-sample semantics of the module."""
    xb = xb.astype(jnp.float32)
    B = xb.shape[0]
    Bp = ((B + B_TILE - 1) // B_TILE) * B_TILE
    xpad = jnp.zeros((Bp, IN_PAD), jnp.float32).at[:B, :INPUT_SIZE].set(xb)

    out = pl.pallas_call(
        network0_kernel,
        out_shape=jax.ShapeDtypeStruct((Bp, OUT_PAD), jnp.float32),
        grid=(Bp // B_TILE,),
        in_specs=[
            pl.BlockSpec((B_TILE, IN_PAD), lambda i: (i, 0)),
            pl.BlockSpec((1, VEC_LEN), lambda i: (0, 0)),
            pl.BlockSpec((IN_PAD, N_PAD), lambda i: (0, 0)),
            pl.BlockSpec((N_PAD, MF_COLS), lambda i: (0, 0)),
            pl.BlockSpec((A1_PAD, A2_PAD), lambda i: (0, 0)),
            pl.BlockSpec((A2_PAD, OUT_PAD), lambda i: (0, 0)),
        ],
        out_specs=pl.BlockSpec((B_TILE, OUT_PAD), lambda i: (i, 0)),
        compiler_params=pltpu.CompilerParams(
            dimension_semantics=("parallel",),
            vmem_limit_bytes=16 * 1024 * 1024),   # total footprint ~0.6 MiB
    )(xpad, prep["vecs"], prep["w1"], prep["mf"], prep["m2"], prep["w3"])
    return out[:B, :OUTPUT_SIZE]


def network0_pallas(x, prep):
    """Single-example module semantics: x (input_size,) -> (output_size,)."""
    return network0_pallas_batch(x.reshape(1, INPUT_SIZE), prep).reshape(-1)


def network0_reference(x, p):
    """Pure-JAX f32 replica of the PyTorch forward (correctness oracle)."""
    PREC = jax.lax.Precision.HIGHEST
    xr = x.reshape(1, -1)
    mu = jnp.mean(xr)
    var = jnp.mean((xr - mu) ** 2)
    xn = (xr - mu) / jnp.sqrt(var + LN_EPS) * p["g1"] + p["be1"]
    h1 = jnp.matmul(xn, p["W1"].T, precision=PREC) + p["b1"]        # LeakyReLU(1)=id
    x0 = jnp.matmul(h1, p["W01"].T, precision=PREC) + p["b01"]
    inp = h1.reshape(1, 1, -1)                                       # NCH
    c1 = jax.lax.conv_general_dilated(inp, p["Wc1"], (S1,), [(P1, P1)],
                                      dimension_numbers=("NCH", "OIH", "NCH"),
                                      precision=PREC)
    a1 = jax.nn.sigmoid(c1 + p["bc1"].reshape(1, -1, 1))
    c2 = jax.lax.conv_general_dilated(a1, p["Wc2"], (S2,), [(P2, P2)],
                                      dimension_numbers=("NCH", "OIH", "NCH"),
                                      precision=PREC)
    a2 = jax.nn.sigmoid(c2 + p["bc2"].reshape(1, -1, 1))
    flat = a2.reshape(-1)                                            # channel-major flatten
    y = jnp.matmul(flat, p["W3"].T, precision=PREC) + p["b3"]
    y = y + x0.reshape(-1)
    return jax.nn.sigmoid(y) * TWO_PI


if __name__ == "__main__":
    key = jax.random.PRNGKey(0)
    pkey, xkey, bkey = jax.random.split(key, 3)
    params = init_params(pkey)
    prep = prepare_params(params)       # one-time host-side prep (hoisted out of call path)

    # Single example (exact module semantics).
    x = jax.random.normal(xkey, (INPUT_SIZE,), jnp.float32)
    out = jax.block_until_ready(network0_pallas(x, prep))
    ref = jax.block_until_ready(network0_reference(x, params))
    assert out.shape == (OUTPUT_SIZE,), out.shape
    # Tolerance accounts for bf16 weights/activations in the MXU dots (f32 accumulate).
    np.testing.assert_allclose(np.asarray(out), np.asarray(ref), rtol=3e-2, atol=3e-2)

    # Small batch through the same kernel (grid over row tiles, padded to B_TILE).
    xb = jax.random.normal(bkey, (6, INPUT_SIZE), jnp.float32)
    outb = jax.block_until_ready(network0_pallas_batch(xb, prep))
    refb = jnp.stack([network0_reference(xb[i], params) for i in range(6)])
    np.testing.assert_allclose(np.asarray(outb), np.asarray(refb), rtol=3e-2, atol=3e-2)

    print("KERNEL_OK")
</pallas_src>

<mosaic_0001>
module attributes {stable_mosaic.version = 11 : i64} {
  func.func @network0_kernel(%arg0: i32, %arg1: memref<8x128xf32, #tpu.memory_space<vmem>>, %arg2: memref<1x1408xf32, #tpu.memory_space<vmem>>, %arg3: memref<128x128xbf16, #tpu.memory_space<vmem>>, %arg4: memref<128x640xbf16, #tpu.memory_space<vmem>>, %arg5: memref<512x256xbf16, #tpu.memory_space<vmem>>, %arg6: memref<256x128xbf16, #tpu.memory_space<vmem>>, %arg7: memref<8x128xf32, #tpu.memory_space<vmem>>) attributes {dimension_semantics = [#tpu.dimension_semantics<parallel>], iteration_bounds = array<i64: 1>, scalar_prefetch = 0 : i64, scratch_operands = 0 : i64, tpu.core_type = #tpu.core_type<tc>, window_params = [{transform_indices = @transform_0, window_bounds = array<i64: 8, 128>}, {pipeline_mode = #tpu.pipeline_mode<synchronous>, transform_indices = @transform_1, window_bounds = array<i64: 1, 1408>}, {pipeline_mode = #tpu.pipeline_mode<synchronous>, transform_indices = @transform_2, window_bounds = array<i64: 128, 128>}, {pipeline_mode = #tpu.pipeline_mode<synchronous>, transform_indices = @transform_3, window_bounds = array<i64: 128, 640>}, {pipeline_mode = #tpu.pipeline_mode<synchronous>, transform_indices = @transform_4, window_bounds = array<i64: 512, 256>}, {pipeline_mode = #tpu.pipeline_mode<synchronous>, transform_indices = @transform_5, window_bounds = array<i64: 256, 128>}, {transform_indices = @transform_6, window_bounds = array<i64: 8, 128>}]} {
    %c0 = arith.constant 0 : index
    %c0_0 = arith.constant 0 : index
    %0 = vector.load %arg1[%c0, %c0_0] : memref<8x128xf32, #tpu.memory_space<vmem>>, vector<8x128xf32>
    %cst = arith.constant dense<0.000000e+00> : vector<8xf32>
    %1 = vector.multi_reduction <add>, %0, %cst [1] : vector<8x128xf32> to vector<8xf32>
    %2 = vector.shape_cast %1 : vector<8xf32> to vector<8x1xf32>
    %3 = arith.mulf %0, %0 : vector<8x128xf32>
    %cst_1 = arith.constant dense<0.000000e+00> : vector<8xf32>
    %4 = vector.multi_reduction <add>, %3, %cst_1 [1] : vector<8x128xf32> to vector<8xf32>
    %5 = vector.shape_cast %4 : vector<8xf32> to vector<8x1xf32>
    %cst_2 = arith.constant 1.562500e-02 : f32
    %6 = vector.broadcast %cst_2 : f32 to vector<8x1xf32>
    %7 = arith.mulf %2, %6 : vector<8x1xf32>
    %cst_3 = arith.constant 1.562500e-02 : f32
    %8 = vector.broadcast %cst_3 : f32 to vector<8x1xf32>
    %9 = arith.mulf %5, %8 : vector<8x1xf32>
    %10 = arith.mulf %7, %7 : vector<8x1xf32>
    %11 = arith.subf %9, %10 : vector<8x1xf32>
    %c0_4 = arith.constant 0 : index
    %c0_5 = arith.constant 0 : index
    %12 = vector.load %arg2[%c0_4, %c0_5] : memref<1x1408xf32, #tpu.memory_space<vmem>>, vector<1x128xf32>
    %c0_6 = arith.constant 0 : index
    %c128 = arith.constant 128 : index
    %13 = vector.load %arg2[%c0_6, %c128] : memref<1x1408xf32, #tpu.memory_space<vmem>>, vector<1x128xf32>
    %14 = vector.broadcast %7 : vector<8x1xf32> to vector<8x128xf32>
    %15 = arith.subf %0, %14 : vector<8x128xf32>
    %cst_7 = arith.constant 9.99999974E-6 : f32
    %16 = vector.broadcast %cst_7 : f32 to vector<8x1xf32>
    %17 = arith.addf %11, %16 : vector<8x1xf32>
    %18 = math.rsqrt %17 : vector<8x1xf32>
    %19 = vector.broadcast %18 : vector<8x1xf32> to vector<8x128xf32>
    %20 = arith.mulf %15, %19 : vector<8x128xf32>
    %21 = vector.broadcast %12 : vector<1x128xf32> to vector<8x128xf32>
    %22 = arith.mulf %20, %21 : vector<8x128xf32>
    %23 = vector.broadcast %13 : vector<1x128xf32> to vector<8x128xf32>
    %24 = arith.addf %22, %23 : vector<8x128xf32>
    %c0_8 = arith.constant 0 : index
    %c256 = arith.constant 256 : index
    %25 = vector.load %arg2[%c0_8, %c256] : memref<1x1408xf32, #tpu.memory_space<vmem>>, vector<1x128xf32>
    %26 = arith.truncf %24 : vector<8x128xf32> to vector<8x128xbf16>
    %c0_9 = arith.constant 0 : index
    %c0_10 = arith.constant 0 : index
    %27 = vector.load %arg3[%c0_9, %c0_10] : memref<128x128xbf16, #tpu.memory_space<vmem>>, vector<128x128xbf16>
    %cst_11 = arith.constant dense<0.000000e+00> : vector<8x128xf32>
    %28 = tpu.matmul %26, %27, %cst_11 {dimension_numbers = #tpu.dot_dimension_numbers<[1], [0], [0], [1], [0, 0, 1, 1], [], []>} : vector<8x128xbf16>, vector<128x128xbf16>, vector<8x128xf32> -> vector<8x128xf32>
    %29 = vector.broadcast %25 : vector<1x128xf32> to vector<8x128xf32>
    %30 = arith.addf %28, %29 : vector<8x128xf32>
    %c0_12 = arith.constant 0 : index
    %c384 = arith.constant 384 : index
    %31 = vector.load %arg2[%c0_12, %c384] : memref<1x1408xf32, #tpu.memory_space<vmem>>, vector<1x640xf32>
    %32 = arith.truncf %30 : vector<8x128xf32> to vector<8x128xbf16>
    %c0_13 = arith.constant 0 : index
    %c0_14 = arith.constant 0 : index
    %33 = vector.load %arg4[%c0_13, %c0_14] : memref<128x640xbf16, #tpu.memory_space<vmem>>, vector<128x640xbf16>
    %cst_15 = arith.constant dense<0.000000e+00> : vector<8x640xf32>
    %34 = tpu.matmul %32, %33, %cst_15 {dimension_numbers = #tpu.dot_dimension_numbers<[1], [0], [0], [1], [0, 0, 1, 1], [], []>} : vector<8x128xbf16>, vector<128x640xbf16>, vector<8x640xf32> -> vector<8x640xf32>
    %35 = vector.broadcast %31 : vector<1x640xf32> to vector<8x640xf32>
    %36 = arith.addf %34, %35 : vector<8x640xf32>
    %37 = vector.extract_strided_slice %36 {offsets = [0, 0], sizes = [8, 512], strides = [1, 1]} : vector<8x640xf32> to vector<8x512xf32>
    %38 = arith.negf %37 : vector<8x512xf32>
    %39 = math.exp %38 : vector<8x512xf32>
    %cst_16 = arith.constant 1.000000e+00 : f32
    %40 = vector.broadcast %cst_16 : f32 to vector<8x512xf32>
    %41 = arith.addf %40, %39 : vector<8x512xf32>
    %42 = arith.divf %40, %41 : vector<8x512xf32>
    %43 = vector.extract_strided_slice %36 {offsets = [0, 512], sizes = [8, 128], strides = [1, 1]} : vector<8x640xf32> to vector<8x128xf32>
    %c0_17 = arith.constant 0 : index
    %c1024 = arith.constant 1024 : index
    %44 = vector.load %arg2[%c0_17, %c1024] : memref<1x1408xf32, #tpu.memory_space<vmem>>, vector<1x256xf32>
    %45 = arith.truncf %42 : vector<8x512xf32> to vector<8x512xbf16>
    %c0_18 = arith.constant 0 : index
    %c0_19 = arith.constant 0 : index
    %46 = vector.load %arg5[%c0_18, %c0_19] : memref<512x256xbf16, #tpu.memory_space<vmem>>, vector<512x256xbf16>
    %cst_20 = arith.constant dense<0.000000e+00> : vector<8x256xf32>
    %47 = tpu.matmul %45, %46, %cst_20 {dimension_numbers = #tpu.dot_dimension_numbers<[1], [0], [0], [1], [0, 0, 1, 1], [], []>} : vector<8x512xbf16>, vector<512x256xbf16>, vector<8x256xf32> -> vector<8x256xf32>
    %48 = vector.broadcast %44 : vector<1x256xf32> to vector<8x256xf32>
    %49 = arith.addf %47, %48 : vector<8x256xf32>
    %50 = arith.negf %49 : vector<8x256xf32>
    %51 = math.exp %50 : vector<8x256xf32>
    %cst_21 = arith.constant 1.000000e+00 : f32
    %52 = vector.broadcast %cst_21 : f32 to vector<8x256xf32>
    %53 = arith.addf %52, %51 : vector<8x256xf32>
    %54 = arith.divf %52, %53 : vector<8x256xf32>
    %c0_22 = arith.constant 0 : index
    %c1280 = arith.constant 1280 : index
    %55 = vector.load %arg2[%c0_22, %c1280] : memref<1x1408xf32, #tpu.memory_space<vmem>>, vector<1x128xf32>
    %56 = arith.truncf %54 : vector<8x256xf32> to vector<8x256xbf16>
    %c0_23 = arith.constant 0 : index
    %c0_24 = arith.constant 0 : index
    %57 = vector.load %arg6[%c0_23, %c0_24] : memref<256x128xbf16, #tpu.memory_space<vmem>>, vector<256x128xbf16>
    %cst_25 = arith.constant dense<0.000000e+00> : vector<8x128xf32>
    %58 = tpu.matmul %56, %57, %cst_25 {dimension_numbers = #tpu.dot_dimension_numbers<[1], [0], [0], [1], [0, 0, 1, 1], [], []>} : vector<8x256xbf16>, vector<256x128xbf16>, vector<8x128xf32> -> vector<8x128xf32>
    %59 = vector.broadcast %55 : vector<1x128xf32> to vector<8x128xf32>
    %60 = arith.addf %58, %59 : vector<8x128xf32>
    %61 = arith.addf %60, %43 : vector<8x128xf32>
    %62 = arith.negf %61 : vector<8x128xf32>
    %63 = math.exp %62 : vector<8x128xf32>
    %cst_26 = arith.constant 1.000000e+00 : f32
    %64 = vector.broadcast %cst_26 : f32 to vector<8x128xf32>
    %65 = arith.addf %64, %63 : vector<8x128xf32>
    %66 = arith.divf %64, %65 : vector<8x128xf32>
    %cst_27 = arith.constant 6.28318548 : f32
    %67 = vector.broadcast %cst_27 : f32 to vector<8x128xf32>
    %68 = arith.mulf %66, %67 : vector<8x128xf32>
    %c0_28 = arith.constant 0 : index
    %c0_29 = arith.constant 0 : index
    %69 = vector.load %arg7[%c0_28, %c0_29] : memref<8x128xf32, #tpu.memory_space<vmem>>, vector<8x128xf32>
    tpu.vector_store %arg7[%c0_28, %c0_29], %68 {strides = array<i32>} : memref<8x128xf32, #tpu.memory_space<vmem>>, vector<8x128xf32>,
    return
  }
  func.func @transform_0(%arg0: i32) -> (i32, i32) {
    %c0_i32 = arith.constant 0 : i32
    %c0_i32_0 = arith.constant 0 : i32
    return %arg0, %c0_i32 : i32, i32
  }
  func.func @transform_1(%arg0: i32) -> (i32, i32) {
    %c0_i32 = arith.constant 0 : i32
    %c0_i32_0 = arith.constant 0 : i32
    %c0_i32_1 = arith.constant 0 : i32
    return %c0_i32, %c0_i32_0 : i32, i32
  }
  func.func @transform_2(%arg0: i32) -> (i32, i32) {
    %c0_i32 = arith.constant 0 : i32
    %c0_i32_0 = arith.constant 0 : i32
    %c0_i32_1 = arith.constant 0 : i32
    return %c0_i32, %c0_i32_0 : i32, i32
  }
  func.func @transform_3(%arg0: i32) -> (i32, i32) {
    %c0_i32 = arith.constant 0 : i32
    %c0_i32_0 = arith.constant 0 : i32
    %c0_i32_1 = arith.constant 0 : i32
    return %c0_i32, %c0_i32_0 : i32, i32
  }
  func.func @transform_4(%arg0: i32) -> (i32, i32) {
    %c0_i32 = arith.constant 0 : i32
    %c0_i32_0 = arith.constant 0 : i32
    %c0_i32_1 = arith.constant 0 : i32
    return %c0_i32, %c0_i32_0 : i32, i32
  }
  func.func @transform_5(%arg0: i32) -> (i32, i32) {
    %c0_i32 = arith.constant 0 : i32
    %c0_i32_0 = arith.constant 0 : i32
    %c0_i32_1 = arith.constant 0 : i32
    return %c0_i32, %c0_i32_0 : i32, i32
  }
  func.func @transform_6(%arg0: i32) -> (i32, i32) {
    %c0_i32 = arith.constant 0 : i32
    %c0_i32_0 = arith.constant 0 : i32
    return %arg0, %c0_i32 : i32, i32
  }
}

</mosaic_0001>

<llo_original>
// kernel: tpu_custom_call.1
$region0: #{tpu_custom_call.1}
  #allocation0 [shape = 'u32[]', space=smem, size = 0x4, offset = 0x4, fixed_abs, tag = 'smem constant byte address 0x4 - core index']
  #allocation1 [shape = 'u32[72,128]{1,0:T(1,128)}', space=vmem, size = 0x9000, scoped, tag = 'internal scratch']
  %s0 = inlined_call_operand.hbm [shape: f32[8,128], index: 0, kind: input, shape index: {}]
  %s1 = inlined_call_operand.hbm [shape: f32[1,1408], index: 1, kind: input, shape index: {}]
  %s2 = inlined_call_operand.hbm [shape: bf16[128,128], index: 2, kind: input, shape index: {}]
  %s3 = inlined_call_operand.hbm [shape: bf16[128,640], index: 3, kind: input, shape index: {}]
  %s4 = inlined_call_operand.hbm [shape: bf16[512,256], index: 4, kind: input, shape index: {}]
  %s5 = inlined_call_operand.hbm [shape: bf16[256,128], index: 5, kind: input, shape index: {}]
  %s6 = inlined_call_operand.hbm [shape: f32[8,128], index: 6, kind: output, shape index: {}]
  %s7 = sld [smem:[#allocation0]]
  $region58: #{tpu_custom_call.1} parent=0
    _
  %s9 = ssub.s32 1, %s7
  %s10 = scalar_select 0, %s9, %s7
  $region1: #{tpu_custom_call.1} parent=0
    #allocation2 [shape = 'u8[4096]{0}', space=vmem, size = 0x1000, scoped, tag = 'input window, operand 0, single buffered']
    #allocation3 [shape = 's32[1]{0}', space=sflag, size = 0x4, scoped, tag = 'scoped memory for tpu_custom_call.1']
    #allocation4 [shape = 's32[1]{0}', space=sflag, size = 0x4, scoped, tag = 'scoped memory for tpu_custom_call.1']
    #allocation5 [shape = 'u8[5632]{0}', space=vmem, size = 0x1800, scoped, tag = 'input window, operand 1, single buffered']
    #allocation6 [shape = 's32[1]{0}', space=sflag, size = 0x4, scoped, tag = 'scoped memory for tpu_custom_call.1']
    #allocation7 [shape = 'u8[32768]{0}', space=vmem, size = 0x8000, scoped, tag = 'input window, operand 2, single buffered']
    #allocation8 [shape = 'u8[163840]{0}', space=vmem, size = 0x28000, scoped, tag = 'input window, operand 3, single buffered']
    #allocation9 [shape = 's32[1]{0}', space=sflag, size = 0x4, scoped, tag = 'scoped memory for tpu_custom_call.1']
    #allocation10 [shape = 'u8[262144]{0}', space=vmem, size = 0x40000, scoped, tag = 'input window, operand 4, single buffered']
    #allocation11 [shape = 'u8[65536]{0}', space=vmem, size = 0x10000, scoped, tag = 'input window, operand 5, single buffered']
    #allocation12 [shape = 's32[1]{0}', space=sflag, size = 0x4, scoped, tag = 'scoped memory for tpu_custom_call.1']
    #allocation13 [shape = 'u8[4096]{0}', space=vmem, size = 0x1000, scoped, tag = 'output window, operand 0, single buffered']
    %11 = vsyncpa [#allocation3], 0
    %12 = vsyncpa [#allocation6], 0
    %13 = vsyncpa [#allocation9], 0
    %14 = vsyncpa [#allocation12], 0
    %15 = vsyncpa [#allocation4], 0
    // Predicated region
    $region2: #{tpu_custom_call.1} parent=1 // pred_check
      _
    $region3: #{tpu_custom_call.1} parent=1 // pred_check_branch
      %17 = sbr.rel (0) target = $region5
    $region4: #{tpu_custom_call.1} parent=1 // pred_region
      %19 = vsyncadd [#allocation3], 0
      %s21 = sshll.u32 %s0, 4
      %s22 = int_to_ptr.hbm [resolvable:$true] %s21
      %s23 = sshll.u32 [#allocation2], 4
      %s24 = int_to_ptr.vmem [resolvable:$true] %s23
      %26 = dma.hbm_to_vmem [thread:$0]  %s22, 128, %s24, [#allocation3]
    $region5: #{tpu_custom_call.1} parent=1 // pred_fallthru
      _
    // Predicated region
    $region6: #{tpu_custom_call.1} parent=1 // pred_check
      _
    $region7: #{tpu_custom_call.1} parent=1 // pred_check_branch
      %28 = sbr.rel (0) target = $region9
    $region8: #{tpu_custom_call.1} parent=1 // pred_region
      %30 = vsyncadd [#allocation6], 0
      %s32 = sshll.u32 %s1, 4
      %s33 = int_to_ptr.hbm [resolvable:$true] %s32
      %s34 = sshll.u32 [#allocation5], 4
      %s35 = int_to_ptr.vmem [resolvable:$true] %s34
      %37 = dma.hbm_to_vmem [thread:$0]  %s33, 176, %s35, [#allocation6]
    $region9: #{tpu_custom_call.1} parent=1 // pred_fallthru
      _
    // Predicated region
    $region10: #{tpu_custom_call.1} parent=1 // pred_check
      _
    $region11: #{tpu_custom_call.1} parent=1 // pred_check_branch
      %39 = sbr.rel (0) target = $region13
    $region12: #{tpu_custom_call.1} parent=1 // pred_region
      %41 = vsyncadd [#allocation6], 0
      %s42 = sshll.u32 %s2, 4
      %s43 = int_to_ptr.hbm [resolvable:$true] %s42
      %s44 = sshll.u32 [#allocation7], 4
      %s45 = int_to_ptr.vmem [resolvable:$true] %s44
      %50 = dma.hbm_to_vmem [thread:$0]  %s43, 1024, %s45, [#allocation6], 64, 64, 4
    $region13: #{tpu_custom_call.1} parent=1 // pred_fallthru
      _
    // Predicated region
    $region14: #{tpu_custom_call.1} parent=1 // pred_check
      _
    $region15: #{tpu_custom_call.1} parent=1 // pred_check_branch
      %52 = sbr.rel (0) target = $region17
    $region16: #{tpu_custom_call.1} parent=1 // pred_region
      %54 = vsyncadd [#allocation9], 0
      %s55 = sshll.u32 %s3, 4
      %s56 = int_to_ptr.hbm [resolvable:$true] %s55
      %s57 = sshll.u32 [#allocation8], 4
      %s58 = int_to_ptr.vmem [resolvable:$true] %s57
      %63 = dma.hbm_to_vmem [thread:$0]  %s56, 5120, %s58, [#allocation9], 320, 320, 20
    $region17: #{tpu_custom_call.1} parent=1 // pred_fallthru
      _
    // Predicated region
    $region18: #{tpu_custom_call.1} parent=1 // pred_check
      _
    $region19: #{tpu_custom_call.1} parent=1 // pred_check_branch
      %65 = sbr.rel (0) target = $region21
    $region20: #{tpu_custom_call.1} parent=1 // pred_region
      %67 = vsyncadd [#allocation9], 0
      %s68 = sshll.u32 %s4, 4
      %s69 = int_to_ptr.hbm [resolvable:$true] %s68
      %s70 = sshll.u32 [#allocation10], 4
      %s71 = int_to_ptr.vmem [resolvable:$true] %s70
      %76 = dma.hbm_to_vmem [thread:$0]  %s69, 8192, %s71, [#allocation9], 128, 128, 8
    $region21: #{tpu_custom_call.1} parent=1 // pred_fallthru
      _
    // Predicated region
    $region22: #{tpu_custom_call.1} parent=1 // pred_check
      _
    $region23: #{tpu_custom_call.1} parent=1 // pred_check_branch
      %78 = sbr.rel (0) target = $region25
    $region24: #{tpu_custom_call.1} parent=1 // pred_region
      %80 = vsyncadd [#allocation12], 0
      %s81 = sshll.u32 %s5, 4
      %s82 = int_to_ptr.hbm [resolvable:$true] %s81
      %s83 = sshll.u32 [#allocation11], 4
      %s84 = int_to_ptr.vmem [resolvable:$true] %s83
      %89 = dma.hbm_to_vmem [thread:$0]  %s82, 2048, %s84, [#allocation12], 64, 64, 4
    $region25: #{tpu_custom_call.1} parent=1 // pred_fallthru
      _
    // Predicated region
    $region26: #{tpu_custom_call.1} parent=1 // pred_check
      _
    $region27: #{tpu_custom_call.1} parent=1 // pred_check_branch
      %91 = sbr.rel (0) target = $region29
    $region28: #{tpu_custom_call.1} parent=1 // pred_region
      %93 = dma.done [#allocation3], 128
    $region29: #{tpu_custom_call.1} parent=1 // pred_fallthru
      _
    // Predicated region
    $region30: #{tpu_custom_call.1} parent=1 // pred_check
      _
    $region31: #{tpu_custom_call.1} parent=1 // pred_check_branch
      %95 = sbr.rel (0) target = $region33
    $region32: #{tpu_custom_call.1} parent=1 // pred_region
      %97 = dma.done [#allocation6], 176
    $region33: #{tpu_custom_call.1} parent=1 // pred_fallthru
      _
    // Predicated region
    $region34: #{tpu_custom_call.1} parent=1 // pred_check
      _
    $region35: #{tpu_custom_call.1} parent=1 // pred_check_branch
      %99 = sbr.rel (0) target = $region37
    $region36: #{tpu_custom_call.1} parent=1 // pred_region
      %101 = dma.done [#allocation6], 1024
    $region37: #{tpu_custom_call.1} parent=1 // pred_fallthru
      _
    // Predicated region
    $region38: #{tpu_custom_call.1} parent=1 // pred_check
      _
    $region39: #{tpu_custom_call.1} parent=1 // pred_check_branch
      %103 = sbr.rel (0) target = $region41
    $region40: #{tpu_custom_call.1} parent=1 // pred_region
      %105 = dma.done [#allocation9], 5120
    $region41: #{tpu_custom_call.1} parent=1 // pred_fallthru
      _
    // Predicated region
    $region42: #{tpu_custom_call.1} parent=1 // pred_check
      _
    $region43: #{tpu_custom_call.1} parent=1 // pred_check_branch
      %107 = sbr.rel (0) target = $region45
    $region44: #{tpu_custom_call.1} parent=1 // pred_region
      %109 = dma.done [#allocation9], 8192
    $region45: #{tpu_custom_call.1} parent=1 // pred_fallthru
      _
    // Predicated region
    $region46: #{tpu_custom_call.1} parent=1 // pred_check
      _
    $region47: #{tpu_custom_call.1} parent=1 // pred_check_branch
      %111 = sbr.rel (0) target = $region49
    $region48: #{tpu_custom_call.1} parent=1 // pred_region
      %113 = dma.done [#allocation12], 2048
    $region49: #{tpu_custom_call.1} parent=1 // pred_fallthru
      _
    %v114 = vld [vmem:[#allocation2] sm:$0xff]
    %115 = vadd.xlane.f32.xlu0 %v114
    %v116 = vpop.xlane.xlu0 %115
    %v117 = vmul.f32 %v114, %v114
    %118 = vadd.xlane.f32.xlu0 %v117
    %v119 = vpop.xlane.xlu0 %118
    %v120 = vmul.f32 %v116, 0.015625
    %v121 = vmul.f32 %v119, 0.015625
    %v122 = vmul.f32 %v120, %v120
    %v123 = vsub.f32 %v121, %v122
    %v124 = vld [vmem:[#allocation5] sm:$0x1]
    %v125 = vld [vmem:[#allocation5 + $0x1] sm:$0x1]
    %v126 = vsub.f32 %v114, %v120
    %v127 = vadd.f32 %v123, 1e-05
    %v128 = vrsqrt.pop %v127
    %v129 = vmul.f32 %v128, %v127
    %v130 = vmul.f32 %v129, %v128
    %v131 = vmul.f32 0.5, %v130
    %v132 = vsub.f32 1.5, %v131
    %v133 = vmul.f32 %v128, %v132
    %vm134 = vweird.f32 %v127
    %vm135 = vweird.f32 %v128
    %vm136 = vmor %vm134, %vm135
    %v137 = vsel %vm136, %v128, %v133
    %v138 = vmul.f32 %v126, %v137
    %v140 = vperm.slane %v124, 0
    %v142 = vmul.f32 %v138, %v140
    %v144 = vperm.slane %v125, 0
    %v146 = vadd.f32 %v142, %v144
    %v147 = vld [vmem:[#allocation5 + $0x2] sm:$0x1]
    %v148 = vpack.c.bf16 %v146, %v146
    %v149 = vld [vmem:[#allocation7] sm:$0xf]
    %v150 = vld [vmem:[#allocation7 + $0x4] sm:$0xf]
    %v151 = vld [vmem:[#allocation7 + $0x8] sm:$0xf]
    %v152 = vld [vmem:[#allocation7 + $0xc] sm:$0xf]
    %v153 = vld [vmem:[#allocation7 + $0x10] sm:$0xf]
    %v154 = vld [vmem:[#allocation7 + $0x14] sm:$0xf]
    %v155 = vld [vmem:[#allocation7 + $0x18] sm:$0xf]
    %v156 = vld [vmem:[#allocation7 + $0x1c] sm:$0xf]
    %v157 = vld [vmem:[#allocation7 + $0x20] sm:$0xf]
    %v158 = vld [vmem:[#allocation7 + $0x24] sm:$0xf]
    %v159 = vld [vmem:[#allocation7 + $0x28] sm:$0xf]
    %v160 = vld [vmem:[#allocation7 + $0x2c] sm:$0xf]
    %v161 = vld [vmem:[#allocation7 + $0x30] sm:$0xf]
    %v162 = vld [vmem:[#allocation7 + $0x34] sm:$0xf]
    %v163 = vld [vmem:[#allocation7 + $0x38] sm:$0xf]
    %v164 = vld [vmem:[#allocation7 + $0x3c] sm:$0xf]
    %v166 = vperm.slane %v147, 0
    %v184 = vunpack.c.l.b16 %v149
    %v185 = vunpack.c.l.b16 %v150
    %v186 = vunpack.c.l.b16 %v151
    %v187 = vunpack.c.l.b16 %v152
    %v188 = vunpack.c.l.b16 %v153
    %v189 = vunpack.c.l.b16 %v154
    %v190 = vunpack.c.l.b16 %v155
    %v191 = vunpack.c.l.b16 %v156
    %v192 = vunpack.c.l.b16 %v157
    %v193 = vunpack.c.l.b16 %v158
    %v194 = vunpack.c.l.b16 %v159
    %v195 = vunpack.c.l.b16 %v160
    %v196 = vunpack.c.l.b16 %v161
    %v197 = vunpack.c.l.b16 %v162
    %v198 = vunpack.c.l.b16 %v163
    %v199 = vunpack.c.l.b16 %v164
    %v200 = vpack.c.b16 %v185, %v184
    %v201 = vpack.c.b16 %v187, %v186
    %v202 = vpack.c.b16 %v189, %v188
    %v203 = vpack.c.b16 %v191, %v190
    %v204 = vpack.c.b16 %v193, %v192
    %v205 = vpack.c.b16 %v195, %v194
    %v206 = vpack.c.b16 %v197, %v196
    %v207 = vpack.c.b16 %v199, %v198
    %216 = vmatpush.bf16.msra.mxu0 %v207
    %217 = vmatpush.bf16.msra.mxu0 %v206
    %218 = vmatpush.bf16.msra.mxu0 %v205
    %219 = vmatpush.bf16.msra.mxu0 %v204
    %220 = vmatpush.bf16.msra.mxu0 %v203
    %221 = vmatpush.bf16.msra.mxu0 %v202
    %222 = vmatpush.bf16.msra.mxu0 %v201
    %223 = vmatpush.bf16.msra.mxu0 %v200
    %224 = vmatmul.bf16.gmra.mxu0 %v148
    %v225 = vpop.f32.mrf.mxu0
    %v226 = vadd.f32 %v166, %v225
    %v227 = vpop.f32.mrf.mxu0
    %228 = vdwg.mxu0
    %v229 = vld [vmem:[#allocation5 + $0x3] sm:$0x1f]
    %v230 = vpack.c.bf16 %v226, %v226
    %v231 = vld [vmem:[#allocation8] sm:$0xff]
    %v232 = vld [vmem:[#allocation8 + $0x8] sm:$0xff]
    %v233 = vld [vmem:[#allocation8 + $0x10] sm:$0xf]
    %v234 = vld [vmem:[#allocation8 + $0x14] sm:$0xff]
    %v235 = vld [vmem:[#allocation8 + $0x1c] sm:$0xff]
    %v236 = vld [vmem:[#allocation8 + $0x24] sm:$0xf]
    %v237 = vld [vmem:[#allocation8 + $0x28] sm:$0xff]
    %v238 = vld [vmem:[#allocation8 + $0x30] sm:$0xff]
    %v239 = vld [vmem:[#allocation8 + $0x38] sm:$0xf]
    %v240 = vld [vmem:[#allocation8 + $0x3c] sm:$0xff]
    %v241 = vld [vmem:[#allocation8 + $0x44] sm:$0xff]
    %v242 = vld [vmem:[#allocation8 + $0x4c] sm:$0xf]
    %v243 = vld [vmem:[#allocation8 + $0x50] sm:$0xff]
    %v244 = vld [vmem:[#allocation8 + $0x58] sm:$0xff]
    %v245 = vld [vmem:[#allocation8 + $0x60] sm:$0xf]
    %v246 = vld [vmem:[#allocation8 + $0x64] sm:$0xff]
    %v247 = vld [vmem:[#allocation8 + $0x6c] sm:$0xff]
    %v248 = vld [vmem:[#allocation8 + $0x74] sm:$0xf]
    %v249 = vld [vmem:[#allocation8 + $0x78] sm:$0xff]
    %v250 = vld [vmem:[#allocation8 + $0x80] sm:$0xff]
    %v251 = vld [vmem:[#allocation8 + $0x88] sm:$0xf]
    %v252 = vld [vmem:[#allocation8 + $0x8c] sm:$0xff]
    %v253 = vld [vmem:[#allocation8 + $0x94] sm:$0xff]
    %v254 = vld [vmem:[#allocation8 + $0x9c] sm:$0xf]
    %v255 = vld [vmem:[#allocation8 + $0xa0] sm:$0xff]
    %v256 = vld [vmem:[#allocation8 + $0xa8] sm:$0xff]
    %v257 = vld [vmem:[#allocation8 + $0xb0] sm:$0xf]
    %v258 = vld [vmem:[#allocation8 + $0xb4] sm:$0xff]
    %v259 = vld [vmem:[#allocation8 + $0xbc] sm:$0xff]
    %v260 = vld [vmem:[#allocation8 + $0xc4] sm:$0xf]
    %v261 = vld [vmem:[#allocation8 + $0xc8] sm:$0xff]
    %v262 = vld [vmem:[#allocation8 + $0xd0] sm:$0xff]
    %v263 = vld [vmem:[#allocation8 + $0xd8] sm:$0xf]
    %v264 = vld [vmem:[#allocation8 + $0xdc] sm:$0xff]
    %v265 = vld [vmem:[#allocation8 + $0xe4] sm:$0xff]
    %v266 = vld [vmem:[#allocation8 + $0xec] sm:$0xf]
    %v267 = vld [vmem:[#allocation8 + $0xf0] sm:$0xff]
    %v268 = vld [vmem:[#allocation8 + $0xf8] sm:$0xff]
    %v269 = vld [vmem:[#allocation8 + $0x100] sm:$0xf]
    %v270 = vld [vmem:[#allocation8 + $0x104] sm:$0xff]
    %v271 = vld [vmem:[#allocation8 + $0x10c] sm:$0xff]
    %v272 = vld [vmem:[#allocation8 + $0x114] sm:$0xf]
    %v273 = vld [vmem:[#allocation8 + $0x118] sm:$0xff]
    %v274 = vld [vmem:[#allocation8 + $0x120] sm:$0xff]
    %v275 = vld [vmem:[#allocation8 + $0x128] sm:$0xf]
    %v276 = vld [vmem:[#allocation8 + $0x12c] sm:$0xff]
    %v277 = vld [vmem:[#allocation8 + $0x134] sm:$0xff]
    %v278 = vld [vmem:[#allocation8 + $0x13c] sm:$0xf]
    %v280 = vperm.slane %v229, 0
    %v281 = vperm.slane %v229, 1
    %v282 = vperm.slane %v229, 2
    %v283 = vperm.slane %v229, 3
    %v284 = vperm.slane %v229, 4
    %v338 = vunpack.c.l.b16 %v231
    %v339 = vunpack.c.h.b16 %v231
    %v340 = vunpack.c.l.b16 %v232
    %v341 = vunpack.c.h.b16 %v232
    %v342 = vunpack.c.l.b16 %v233
    %v343 = vunpack.c.l.b16 %v234
    %v344 = vunpack.c.h.b16 %v234
    %v345 = vunpack.c.l.b16 %v235
    %v346 = vunpack.c.h.b16 %v235
    %v347 = vunpack.c.l.b16 %v236
    %v348 = vunpack.c.l.b16 %v237
    %v349 = vunpack.c.h.b16 %v237
    %v350 = vunpack.c.l.b16 %v238
    %v351 = vunpack.c.h.b16 %v238
    %v352 = vunpack.c.l.b16 %v239
    %v353 = vunpack.c.l.b16 %v240
    %v354 = vunpack.c.h.b16 %v240
    %v355 = vunpack.c.l.b16 %v241
    %v356 = vunpack.c.h.b16 %v241
    %v357 = vunpack.c.l.b16 %v242
    %v358 = vunpack.c.l.b16 %v243
    %v359 = vunpack.c.h.b16 %v243
    %v360 = vunpack.c.l.b16 %v244
    %v361 = vunpack.c.h.b16 %v244
    %v362 = vunpack.c.l.b16 %v245
    %v363 = vunpack.c.l.b16 %v246
    %v364 = vunpack.c.h.b16 %v246
    %v365 = vunpack.c.l.b16 %v247
    %v366 = vunpack.c.h.b16 %v247
    %v367 = vunpack.c.l.b16 %v248
    %v368 = vunpack.c.l.b16 %v249
    %v369 = vunpack.c.h.b16 %v249
    %v370 = vunpack.c.l.b16 %v250
    %v371 = vunpack.c.h.b16 %v250
    %v372 = vunpack.c.l.b16 %v251
    %v373 = vunpack.c.l.b16 %v252
    %v374 = vunpack.c.h.b16 %v252
    %v375 = vunpack.c.l.b16 %v253
    %v376 = vunpack.c.h.b16 %v253
    %v377 = vunpack.c.l.b16 %v254
    %v378 = vunpack.c.l.b16 %v255
    %v379 = vunpack.c.h.b16 %v255
    %v380 = vunpack.c.l.b16 %v256
    %v381 = vunpack.c.h.b16 %v256
    %v382 = vunpack.c.l.b16 %v257
    %v383 = vunpack.c.l.b16 %v258
    %v384 = vunpack.c.h.b16 %v258
    %v385 = vunpack.c.l.b16 %v259
    %v386 = vunpack.c.h.b16 %v259
    %v387 = vunpack.c.l.b16 %v260
    %v388 = vunpack.c.l.b16 %v261
    %v389 = vunpack.c.h.b16 %v261
    %v390 = vunpack.c.l.b16 %v262
    %v391 = vunpack.c.h.b16 %v262
    %v392 = vunpack.c.l.b16 %v263
    %v393 = vunpack.c.l.b16 %v264
    %v394 = vunpack.c.h.b16 %v264
    %v395 = vunpack.c.l.b16 %v265
    %v396 = vunpack.c.h.b16 %v265
    %v397 = vunpack.c.l.b16 %v266
    %v398 = vunpack.c.l.b16 %v267
    %v399 = vunpack.c.h.b16 %v267
    %v400 = vunpack.c.l.b16 %v268
    %v401 = vunpack.c.h.b16 %v268
    %v402 = vunpack.c.l.b16 %v269
    %v403 = vunpack.c.l.b16 %v270
    %v404 = vunpack.c.h.b16 %v270
    %v405 = vunpack.c.l.b16 %v271
    %v406 = vunpack.c.h.b16 %v271
    %v407 = vunpack.c.l.b16 %v272
    %v408 = vunpack.c.l.b16 %v273
    %v409 = vunpack.c.h.b16 %v273
    %v410 = vunpack.c.l.b16 %v274
    %v411 = vunpack.c.h.b16 %v274
    %v412 = vunpack.c.l.b16 %v275
    %v413 = vunpack.c.l.b16 %v276
    %v414 = vunpack.c.h.b16 %v276
    %v415 = vunpack.c.l.b16 %v277
    %v416 = vunpack.c.h.b16 %v277
    %v417 = vunpack.c.l.b16 %v278
    %v418 = vpack.c.b16 %v343, %v338
    %v419 = vpack.c.b16 %v344, %v339
    %v420 = vpack.c.b16 %v345, %v340
    %v421 = vpack.c.b16 %v346, %v341
    %v422 = vpack.c.b16 %v347, %v342
    %v423 = vpack.c.b16 %v353, %v348
    %v424 = vpack.c.b16 %v354, %v349
    %v425 = vpack.c.b16 %v355, %v350
    %v426 = vpack.c.b16 %v356, %v351
    %v427 = vpack.c.b16 %v357, %v352
    %v428 = vpack.c.b16 %v363, %v358
    %v429 = vpack.c.b16 %v364, %v359
    %v430 = vpack.c.b16 %v365, %v360
    %v431 = vpack.c.b16 %v366, %v361
    %v432 = vpack.c.b16 %v367, %v362
    %v433 = vpack.c.b16 %v373, %v368
    %v434 = vpack.c.b16 %v374, %v369
    %v435 = vpack.c.b16 %v375, %v370
    %v436 = vpack.c.b16 %v376, %v371
    %v437 = vpack.c.b16 %v377, %v372
    %v438 = vpack.c.b16 %v383, %v378
    %v439 = vpack.c.b16 %v384, %v379
    %v440 = vpack.c.b16 %v385, %v380
    %v441 = vpack.c.b16 %v386, %v381
    %v442 = vpack.c.b16 %v387, %v382
    %v443 = vpack.c.b16 %v393, %v388
    %v444 = vpack.c.b16 %v394, %v389
    %v445 = vpack.c.b16 %v395, %v390
    %v446 = vpack.c.b16 %v396, %v391
    %v447 = vpack.c.b16 %v397, %v392
    %v448 = vpack.c.b16 %v403, %v398
    %v449 = vpack.c.b16 %v404, %v399
    %v450 = vpack.c.b16 %v405, %v400
    %v451 = vpack.c.b16 %v406, %v401
    %v452 = vpack.c.b16 %v407, %v402
    %v453 = vpack.c.b16 %v413, %v408
    %v454 = vpack.c.b16 %v414, %v409
    %v455 = vpack.c.b16 %v415, %v410
    %v456 = vpack.c.b16 %v416, %v411
    %v457 = vpack.c.b16 %v417, %v412
    %498 = vmatpush.bf16.msra.mxu0 %v453
    %499 = vmatpush.bf16.msra.mxu0 %v448
    %500 = vmatpush.bf16.msra.mxu0 %v443
    %501 = vmatpush.bf16.msra.mxu0 %v438
    %502 = vmatpush.bf16.msra.mxu0 %v433
    %503 = vmatpush.bf16.msra.mxu0 %v428
    %504 = vmatpush.bf16.msra.mxu0 %v423
    %505 = vmatpush.bf16.msra.mxu0 %v418
    %506 = vmatmul.bf16.gmra.mxu0 %v230
    %v507 = vpop.f32.mrf.mxu0
    %v508 = vadd.f32 %v280, %v507
    %v509 = vpop.f32.mrf.mxu0
    %510 = vdwg.mxu0
    %511 = vmatpush.bf16.msra.mxu0 %v454
    %512 = vmatpush.bf16.msra.mxu0 %v449
    %513 = vmatpush.bf16.msra.mxu0 %v444
    %514 = vmatpush.bf16.msra.mxu0 %v439
    %515 = vmatpush.bf16.msra.mxu0 %v434
    %516 = vmatpush.bf16.msra.mxu0 %v429
    %517 = vmatpush.bf16.msra.mxu0 %v424
    %518 = vmatpush.bf16.msra.mxu0 %v419
    %519 = vmatmul.bf16.gmra.mxu0 %v230
    %v520 = vpop.f32.mrf.mxu0
    %v521 = vadd.f32 %v281, %v520
    %v522 = vpop.f32.mrf.mxu0
    %523 = vdwg.mxu0
    %524 = vmatpush.bf16.msra.mxu0 %v455
    %525 = vmatpush.bf16.msra.mxu0 %v450
    %526 = vmatpush.bf16.msra.mxu0 %v445
    %527 = vmatpush.bf16.msra.mxu0 %v440
    %528 = vmatpush.bf16.msra.mxu0 %v435
    %529 = vmatpush.bf16.msra.mxu0 %v430
    %530 = vmatpush.bf16.msra.mxu0 %v425
    %531 = vmatpush.bf16.msra.mxu0 %v420
    %532 = vmatmul.bf16.gmra.mxu0 %v230
    %v533 = vpop.f32.mrf.mxu0
    %v534 = vadd.f32 %v282, %v533
    %v535 = vpop.f32.mrf.mxu0
    %536 = vdwg.mxu0
    %537 = vmatpush.bf16.msra.mxu0 %v456
    %538 = vmatpush.bf16.msra.mxu0 %v451
    %539 = vmatpush.bf16.msra.mxu0 %v446
    %540 = vmatpush.bf16.msra.mxu0 %v441
    %541 = vmatpush.bf16.msra.mxu0 %v436
    %542 = vmatpush.bf16.msra.mxu0 %v431
    %543 = vmatpush.bf16.msra.mxu0 %v426
    %544 = vmatpush.bf16.msra.mxu0 %v421
    %545 = vmatmul.bf16.gmra.mxu0 %v230
    %v546 = vpop.f32.mrf.mxu0
    %v547 = vadd.f32 %v283, %v546
    %v548 = vpop.f32.mrf.mxu0
    %549 = vdwg.mxu0
    %550 = vmatpush.bf16.msra.mxu0 %v457
    %551 = vmatpush.bf16.msra.mxu0 %v452
    %552 = vmatpush.bf16.msra.mxu0 %v447
    %553 = vmatpush.bf16.msra.mxu0 %v442
    %554 = vmatpush.bf16.msra.mxu0 %v437
    %555 = vmatpush.bf16.msra.mxu0 %v432
    %556 = vmatpush.bf16.msra.mxu0 %v427
    %557 = vmatpush.bf16.msra.mxu0 %v422
    %558 = vmatmul.bf16.gmra.mxu0 %v230
    %v559 = vpop.f32.mrf.mxu0
    %v560 = vadd.f32 %v284, %v559
    %v561 = vpop.f32.mrf.mxu0
    %562 = vdwg.mxu0
    %v563 = vxor.u32 %v508, 2147483648
    %v564 = vxor.u32 %v521, 2147483648
    %v565 = vxor.u32 %v534, 2147483648
    %v566 = vxor.u32 %v547, 2147483648
    %v567 = vmul.f32 %v563, 1.442695
    %v568 = vpow.pop %v567
    %v569 = vmul.f32 %v564, 1.442695
    %v570 = vpow.pop %v569
    %v571 = vmul.f32 %v565, 1.442695
    %v572 = vpow.pop %v571
    %v573 = vmul.f32 %v566, 1.442695
    %v574 = vpow.pop %v573
    %v575 = vadd.f32 %v568, 1.0
    %v576 = vadd.f32 %v570, 1.0
    %v577 = vadd.f32 %v572, 1.0
    %v578 = vadd.f32 %v574, 1.0
    %v579 = vrcp.pop %v575
    %v580 = vmul.f32 %v575, %v579
    %v581 = vsub.f32 1.0, %v580
    %v582 = vmul.f32 %v579, %v581
    %v583 = vadd.f32 %v579, %v582
    %vm584 = vweird.f32 %v575
    %vm585 = vweird.f32 %v579
    %vm586 = vmor %vm584, %vm585
    %v587 = vsel %vm586, %v579, %v583
    %v588 = vand.u32 2147483647, %v575
    %vm589 = vcmp.eq.f32.partialorder %v588, 8.507059e+37
    %v590 = vand.u32 %v575, 2147483648
    %v591 = vor.u32 1.1754944e-38, %v590
    %v592 = vsel %vm589, %v591, %v587
    %v593 = vmul.f32 1.0, %v592
    %v594 = vrcp.pop %v576
    %v595 = vmul.f32 %v576, %v594
    %v596 = vsub.f32 1.0, %v595
    %v597 = vmul.f32 %v594, %v596
    %v598 = vadd.f32 %v594, %v597
    %vm599 = vweird.f32 %v576
    %vm600 = vweird.f32 %v594
    %vm601 = vmor %vm599, %vm600
    %v602 = vsel %vm601, %v594, %v598
    %v603 = vand.u32 2147483647, %v576
    %vm604 = vcmp.eq.f32.partialorder %v603, 8.507059e+37
    %v605 = vand.u32 %v576, 2147483648
    %v606 = vor.u32 1.1754944e-38, %v605
    %v607 = vsel %vm604, %v606, %v602
    %v608 = vmul.f32 1.0, %v607
    %v609 = vrcp.pop %v577
    %v610 = vmul.f32 %v577, %v609
    %v611 = vsub.f32 1.0, %v610
    %v612 = vmul.f32 %v609, %v611
    %v613 = vadd.f32 %v609, %v612
    %vm614 = vweird.f32 %v577
    %vm615 = vweird.f32 %v609
    %vm616 = vmor %vm614, %vm615
    %v617 = vsel %vm616, %v609, %v613
    %v618 = vand.u32 2147483647, %v577
    %vm619 = vcmp.eq.f32.partialorder %v618, 8.507059e+37
    %v620 = vand.u32 %v577, 2147483648
    %v621 = vor.u32 1.1754944e-38, %v620
    %v622 = vsel %vm619, %v621, %v617
    %v623 = vmul.f32 1.0, %v622
    %v624 = vrcp.pop %v578
    %v625 = vmul.f32 %v578, %v624
    %v626 = vsub.f32 1.0, %v625
    %v627 = vmul.f32 %v624, %v626
    %v628 = vadd.f32 %v624, %v627
    %vm629 = vweird.f32 %v578
    %vm630 = vweird.f32 %v624
    %vm631 = vmor %vm629, %vm630
    %v632 = vsel %vm631, %v624, %v628
    %v633 = vand.u32 2147483647, %v578
    %vm634 = vcmp.eq.f32.partialorder %v633, 8.507059e+37
    %v635 = vand.u32 %v578, 2147483648
    %v636 = vor.u32 1.1754944e-38, %v635
    %v637 = vsel %vm634, %v636, %v632
    %v638 = vmul.f32 1.0, %v637
    %v639 = vld [vmem:[#allocation5 + $0x8] sm:$0x3]
    %v640 = vpack.c.bf16 %v593, %v593
    %v641 = vpack.c.bf16 %v608, %v608
    %v642 = vpack.c.bf16 %v623, %v623
    %v643 = vpack.c.bf16 %v638, %v638
    %v644 = vld [vmem:[#allocation10] sm:$0xff]
    %v645 = vld [vmem:[#allocation10 + $0x8] sm:$0xff]
    %v646 = vld [vmem:[#allocation10 + $0x10] sm:$0xff]
    %v647 = vld [vmem:[#allocation10 + $0x18] sm:$0xff]
    %v648 = vld [vmem:[#allocation10 + $0x20] sm:$0xff]
    %v649 = vld [vmem:[#allocation10 + $0x28] sm:$0xff]
    %v650 = vld [vmem:[#allocation10 + $0x30] sm:$0xff]
    %v651 = vld [vmem:[#allocation10 + $0x38] sm:$0xff]
    %v652 = vld [vmem:[#allocation10 + $0x40] sm:$0xff]
    %v653 = vld [vmem:[#allocation10 + $0x48] sm:$0xff]
    %v654 = vld [vmem:[#allocation10 + $0x50] sm:$0xff]
    %v655 = vld [vmem:[#allocation10 + $0x58] sm:$0xff]
    %v656 = vld [vmem:[#allocation10 + $0x60] sm:$0xff]
    %v657 = vld [vmem:[#allocation10 + $0x68] sm:$0xff]
    %v658 = vld [vmem:[#allocation10 + $0x70] sm:$0xff]
    %v659 = vld [vmem:[#allocation10 + $0x78] sm:$0xff]
    %v660 = vld [vmem:[#allocation10 + $0x80] sm:$0xff]
    %v661 = vld [vmem:[#allocation10 + $0x88] sm:$0xff]
    %v662 = vld [vmem:[#allocation10 + $0x90] sm:$0xff]
    %v663 = vld [vmem:[#allocation10 + $0x98] sm:$0xff]
    %v664 = vld [vmem:[#allocation10 + $0xa0] sm:$0xff]
    %v665 = vld [vmem:[#allocation10 + $0xa8] sm:$0xff]
    %v666 = vld [vmem:[#allocation10 + $0xb0] sm:$0xff]
    %v667 = vld [vmem:[#allocation10 + $0xb8] sm:$0xff]
    %v668 = vld [vmem:[#allocation10 + $0xc0] sm:$0xff]
    %v669 = vld [vmem:[#allocation10 + $0xc8] sm:$0xff]
    %v670 = vld [vmem:[#allocation10 + $0xd0] sm:$0xff]
    %v671 = vld [vmem:[#allocation10 + $0xd8] sm:$0xff]
    %v672 = vld [vmem:[#allocation10 + $0xe0] sm:$0xff]
    %v673 = vld [vmem:[#allocation10 + $0xe8] sm:$0xff]
    %v674 = vld [vmem:[#allocation10 + $0xf0] sm:$0xff]
    %v675 = vld [vmem:[#allocation10 + $0xf8] sm:$0xff]
    %v676 = vld [vmem:[#allocation10 + $0x100] sm:$0xff]
    %v677 = vld [vmem:[#allocation10 + $0x108] sm:$0xff]
    %v678 = vld [vmem:[#allocation10 + $0x110] sm:$0xff]
    %v679 = vld [vmem:[#allocation10 + $0x118] sm:$0xff]
    %v680 = vld [vmem:[#allocation10 + $0x120] sm:$0xff]
    %v681 = vld [vmem:[#allocation10 + $0x128] sm:$0xff]
    %v682 = vld [vmem:[#allocation10 + $0x130] sm:$0xff]
    %v683 = vld [vmem:[#allocation10 + $0x138] sm:$0xff]
    %v684 = vld [vmem:[#allocation10 + $0x140] sm:$0xff]
    %v685 = vld [vmem:[#allocation10 + $0x148] sm:$0xff]
    %v686 = vld [vmem:[#allocation10 + $0x150] sm:$0xff]
    %v687 = vld [vmem:[#allocation10 + $0x158] sm:$0xff]
    %v688 = vld [vmem:[#allocation10 + $0x160] sm:$0xff]
    %v689 = vld [vmem:[#allocation10 + $0x168] sm:$0xff]
    %v690 = vld [vmem:[#allocation10 + $0x170] sm:$0xff]
    %v691 = vld [vmem:[#allocation10 + $0x178] sm:$0xff]
    %v692 = vld [vmem:[#allocation10 + $0x180] sm:$0xff]
    %v693 = vld [vmem:[#allocation10 + $0x188] sm:$0xff]
    %v694 = vld [vmem:[#allocation10 + $0x190] sm:$0xff]
    %v695 = vld [vmem:[#allocation10 + $0x198] sm:$0xff]
    %v696 = vld [vmem:[#allocation10 + $0x1a0] sm:$0xff]
    %v697 = vld [vmem:[#allocation10 + $0x1a8] sm:$0xff]
    %v698 = vld [vmem:[#allocation10 + $0x1b0] sm:$0xff]
    %v699 = vld [vmem:[#allocation10 + $0x1b8] sm:$0xff]
    %v700 = vld [vmem:[#allocation10 + $0x1c0] sm:$0xff]
    %v701 = vld [vmem:[#allocation10 + $0x1c8] sm:$0xff]
    %v702 = vld [vmem:[#allocation10 + $0x1d0] sm:$0xff]
    %v703 = vld [vmem:[#allocation10 + $0x1d8] sm:$0xff]
    %v704 = vld [vmem:[#allocation10 + $0x1e0] sm:$0xff]
    %v705 = vld [vmem:[#allocation10 + $0x1e8] sm:$0xff]
    %v706 = vld [vmem:[#allocation10 + $0x1f0] sm:$0xff]
    %v707 = vld [vmem:[#allocation10 + $0x1f8] sm:$0xff]
    %v709 = vperm.slane %v639, 0
    %v710 = vperm.slane %v639, 1
    %v777 = vunpack.c.l.b16 %v644
    %v778 = vunpack.c.h.b16 %v644
    %v779 = vunpack.c.l.b16 %v645
    %v780 = vunpack.c.h.b16 %v645
    %v781 = vunpack.c.l.b16 %v646
    %v782 = vunpack.c.h.b16 %v646
    %v783 = vunpack.c.l.b16 %v647
    %v784 = vunpack.c.h.b16 %v647
    %v785 = vunpack.c.l.b16 %v648
    %v786 = vunpack.c.h.b16 %v648
    %v787 = vunpack.c.l.b16 %v649
    %v788 = vunpack.c.h.b16 %v649
    %v789 = vunpack.c.l.b16 %v650
    %v790 = vunpack.c.h.b16 %v650
    %v791 = vunpack.c.l.b16 %v651
    %v792 = vunpack.c.h.b16 %v651
    %v793 = vunpack.c.l.b16 %v652
    %v794 = vunpack.c.h.b16 %v652
    %v795 = vunpack.c.l.b16 %v653
    %v796 = vunpack.c.h.b16 %v653
    %v797 = vunpack.c.l.b16 %v654
    %v798 = vunpack.c.h.b16 %v654
    %v799 = vunpack.c.l.b16 %v655
    %v800 = vunpack.c.h.b16 %v655
    %v801 = vunpack.c.l.b16 %v656
    %v802 = vunpack.c.h.b16 %v656
    %v803 = vunpack.c.l.b16 %v657
    %v804 = vunpack.c.h.b16 %v657
    %v805 = vunpack.c.l.b16 %v658
    %v806 = vunpack.c.h.b16 %v658
    %v807 = vunpack.c.l.b16 %v659
    %v808 = vunpack.c.h.b16 %v659
    %v809 = vunpack.c.l.b16 %v660
    %v810 = vunpack.c.h.b16 %v660
    %v811 = vunpack.c.l.b16 %v661
    %v812 = vunpack.c.h.b16 %v661
    %v813 = vunpack.c.l.b16 %v662
    %v814 = vunpack.c.h.b16 %v662
    %v815 = vunpack.c.l.b16 %v663
    %v816 = vunpack.c.h.b16 %v663
    %v817 = vunpack.c.l.b16 %v664
    %v818 = vunpack.c.h.b16 %v664
    %v819 = vunpack.c.l.b16 %v665
    %v820 = vunpack.c.h.b16 %v665
    %v821 = vunpack.c.l.b16 %v666
    %v822 = vunpack.c.h.b16 %v666
    %v823 = vunpack.c.l.b16 %v667
    %v824 = vunpack.c.h.b16 %v667
    %v825 = vunpack.c.l.b16 %v668
    %v826 = vunpack.c.h.b16 %v668
    %v827 = vunpack.c.l.b16 %v669
    %v828 = vunpack.c.h.b16 %v669
    %v829 = vunpack.c.l.b16 %v670
    %v830 = vunpack.c.h.b16 %v670
    %v831 = vunpack.c.l.b16 %v671
    %v832 = vunpack.c.h.b16 %v671
    %v833 = vunpack.c.l.b16 %v672
    %v834 = vunpack.c.h.b16 %v672
    %v835 = vunpack.c.l.b16 %v673
    %v836 = vunpack.c.h.b16 %v673
    %v837 = vunpack.c.l.b16 %v674
    %v838 = vunpack.c.h.b16 %v674
    %v839 = vunpack.c.l.b16 %v675
    %v840 = vunpack.c.h.b16 %v675
    %v841 = vunpack.c.l.b16 %v676
    %v842 = vunpack.c.h.b16 %v676
    %v843 = vunpack.c.l.b16 %v677
    %v844 = vunpack.c.h.b16 %v677
    %v845 = vunpack.c.l.b16 %v678
    %v846 = vunpack.c.h.b16 %v678
    %v847 = vunpack.c.l.b16 %v679
    %v848 = vunpack.c.h.b16 %v679
    %v849 = vunpack.c.l.b16 %v680
    %v850 = vunpack.c.h.b16 %v680
    %v851 = vunpack.c.l.b16 %v681
    %v852 = vunpack.c.h.b16 %v681
    %v853 = vunpack.c.l.b16 %v682
    %v854 = vunpack.c.h.b16 %v682
    %v855 = vunpack.c.l.b16 %v683
    %v856 = vunpack.c.h.b16 %v683
    %v857 = vunpack.c.l.b16 %v684
    %v858 = vunpack.c.h.b16 %v684
    %v859 = vunpack.c.l.b16 %v685
    %v860 = vunpack.c.h.b16 %v685
    %v861 = vunpack.c.l.b16 %v686
    %v862 = vunpack.c.h.b16 %v686
    %v863 = vunpack.c.l.b16 %v687
    %v864 = vunpack.c.h.b16 %v687
    %v865 = vunpack.c.l.b16 %v688
    %v866 = vunpack.c.h.b16 %v688
    %v867 = vunpack.c.l.b16 %v689
    %v868 = vunpack.c.h.b16 %v689
    %v869 = vunpack.c.l.b16 %v690
    %v870 = vunpack.c.h.b16 %v690
    %v871 = vunpack.c.l.b16 %v691
    %v872 = vunpack.c.h.b16 %v691
    %v873 = vunpack.c.l.b16 %v692
    %v874 = vunpack.c.h.b16 %v692
    %v875 = vunpack.c.l.b16 %v693
    %v876 = vunpack.c.h.b16 %v693
    %v877 = vunpack.c.l.b16 %v694
    %v878 = vunpack.c.h.b16 %v694
    %v879 = vunpack.c.l.b16 %v695
    %v880 = vunpack.c.h.b16 %v695
    %v881 = vunpack.c.l.b16 %v696
    %v882 = vunpack.c.h.b16 %v696
    %v883 = vunpack.c.l.b16 %v697
    %v884 = vunpack.c.h.b16 %v697
    %v885 = vunpack.c.l.b16 %v698
    %v886 = vunpack.c.h.b16 %v698
    %v887 = vunpack.c.l.b16 %v699
    %v888 = vunpack.c.h.b16 %v699
    %v889 = vunpack.c.l.b16 %v700
    %v890 = vunpack.c.h.b16 %v700
    %v891 = vunpack.c.l.b16 %v701
    %v892 = vunpack.c.h.b16 %v701
    %v893 = vunpack.c.l.b16 %v702
    %v894 = vunpack.c.h.b16 %v702
    %v895 = vunpack.c.l.b16 %v703
    %v896 = vunpack.c.h.b16 %v703
    %v897 = vunpack.c.l.b16 %v704
    %v898 = vunpack.c.h.b16 %v704
    %v899 = vunpack.c.l.b16 %v705
    %v900 = vunpack.c.h.b16 %v705
    %v901 = vunpack.c.l.b16 %v706
    %v902 = vunpack.c.h.b16 %v706
    %v903 = vunpack.c.l.b16 %v707
    %v904 = vunpack.c.h.b16 %v707
    %v905 = vpack.c.b16 %v779, %v777
    %v906 = vpack.c.b16 %v780, %v778
    %v907 = vpack.c.b16 %v783, %v781
    %v908 = vpack.c.b16 %v784, %v782
    %v909 = vpack.c.b16 %v787, %v785
    %v910 = vpack.c.b16 %v788, %v786
    %v911 = vpack.c.b16 %v791, %v789
    %v912 = vpack.c.b16 %v792, %v790
    %v913 = vpack.c.b16 %v795, %v793
    %v914 = vpack.c.b16 %v796, %v794
    %v915 = vpack.c.b16 %v799, %v797
    %v916 = vpack.c.b16 %v800, %v798
    %v917 = vpack.c.b16 %v803, %v801
    %v918 = vpack.c.b16 %v804, %v802
    %v919 = vpack.c.b16 %v807, %v805
    %v920 = vpack.c.b16 %v808, %v806
    %v921 = vpack.c.b16 %v811, %v809
    %v922 = vpack.c.b16 %v812, %v810
    %v923 = vpack.c.b16 %v815, %v813
    %v924 = vpack.c.b16 %v816, %v814
    %v925 = vpack.c.b16 %v819, %v817
    %v926 = vpack.c.b16 %v820, %v818
    %v927 = vpack.c.b16 %v823, %v821
    %v928 = vpack.c.b16 %v824, %v822
    %v929 = vpack.c.b16 %v827, %v825
    %v930 = vpack.c.b16 %v828, %v826
    %v931 = vpack.c.b16 %v831, %v829
    %v932 = vpack.c.b16 %v832, %v830
    %v933 = vpack.c.b16 %v835, %v833
    %v934 = vpack.c.b16 %v836, %v834
    %v935 = vpack.c.b16 %v839, %v837
    %v936 = vpack.c.b16 %v840, %v838
    %v937 = vpack.c.b16 %v843, %v841
    %v938 = vpack.c.b16 %v844, %v842
    %v939 = vpack.c.b16 %v847, %v845
    %v940 = vpack.c.b16 %v848, %v846
    %v941 = vpack.c.b16 %v851, %v849
    %v942 = vpack.c.b16 %v852, %v850
    %v943 = vpack.c.b16 %v855, %v853
    %v944 = vpack.c.b16 %v856, %v854
    %v945 = vpack.c.b16 %v859, %v857
    %v946 = vpack.c.b16 %v860, %v858
    %v947 = vpack.c.b16 %v863, %v861
    %v948 = vpack.c.b16 %v864, %v862
    %v949 = vpack.c.b16 %v867, %v865
    %v950 = vpack.c.b16 %v868, %v866
    %v951 = vpack.c.b16 %v871, %v869
    %v952 = vpack.c.b16 %v872, %v870
    %v953 = vpack.c.b16 %v875, %v873
    %v954 = vpack.c.b16 %v876, %v874
    %v955 = vpack.c.b16 %v879, %v877
    %v956 = vpack.c.b16 %v880, %v878
    %v957 = vpack.c.b16 %v883, %v881
    %v958 = vpack.c.b16 %v884, %v882
    %v959 = vpack.c.b16 %v887, %v885
    %v960 = vpack.c.b16 %v888, %v886
    %v961 = vpack.c.b16 %v891, %v889
    %v962 = vpack.c.b16 %v892, %v890
    %v963 = vpack.c.b16 %v895, %v893
    %v964 = vpack.c.b16 %v896, %v894
    %v965 = vpack.c.b16 %v899, %v897
    %v966 = vpack.c.b16 %v900, %v898
    %v967 = vpack.c.b16 %v903, %v901
    %v968 = vpack.c.b16 %v904, %v902
    %1033 = vmatpush.bf16.msra.mxu0 %v919
    %1034 = vmatpush.bf16.msra.mxu0 %v917
    %1035 = vmatpush.bf16.msra.mxu0 %v915
    %1036 = vmatpush.bf16.msra.mxu0 %v913
    %1037 = vmatpush.bf16.msra.mxu0 %v911
    %1038 = vmatpush.bf16.msra.mxu0 %v909
    %1039 = vmatpush.bf16.msra.mxu0 %v907
    %1040 = vmatpush.bf16.msra.mxu0 %v905
    %1041 = vmatmul.bf16.gmra.mxu0 %v640
    %v1042 = vpop.f32.mrf.mxu0
    %v1043 = vadd.f32 %v709, %v1042
    %v1044 = vpop.f32.mrf.mxu0
    %1045 = vdwg.mxu0
    %1046 = vmatpush.bf16.msra.mxu0 %v935
    %1047 = vmatpush.bf16.msra.mxu0 %v933
    %1048 = vmatpush.bf16.msra.mxu0 %v931
    %1049 = vmatpush.bf16.msra.mxu0 %v929
    %1050 = vmatpush.bf16.msra.mxu0 %v927
    %1051 = vmatpush.bf16.msra.mxu0 %v925
    %1052 = vmatpush.bf16.msra.mxu0 %v923
    %1053 = vmatpush.bf16.msra.mxu0 %v921
    %1054 = vmatmul.bf16.gmra.mxu0 %v641
    %v1055 = vpop.f32.mrf.mxu0
    %v1056 = vadd.f32 %v1043, %v1055
    %v1057 = vpop.f32.mrf.mxu0
    %1058 = vdwg.mxu0
    %1059 = vmatpush.bf16.msra.mxu0 %v951
    %1060 = vmatpush.bf16.msra.mxu0 %v949
    %1061 = vmatpush.bf16.msra.mxu0 %v947
    %1062 = vmatpush.bf16.msra.mxu0 %v945
    %1063 = vmatpush.bf16.msra.mxu0 %v943
    %1064 = vmatpush.bf16.msra.mxu0 %v941
    %1065 = vmatpush.bf16.msra.mxu0 %v939
    %1066 = vmatpush.bf16.msra.mxu0 %v937
    %1067 = vmatmul.bf16.gmra.mxu0 %v642
    %v1068 = vpop.f32.mrf.mxu0
    %v1069 = vadd.f32 %v1056, %v1068
    %v1070 = vpop.f32.mrf.mxu0
    %1071 = vdwg.mxu0
    %1072 = vmatpush.bf16.msra.mxu0 %v967
    %1073 = vmatpush.bf16.msra.mxu0 %v965
    %1074 = vmatpush.bf16.msra.mxu0 %v963
    %1075 = vmatpush.bf16.msra.mxu0 %v961
    %1076 = vmatpush.bf16.msra.mxu0 %v959
    %1077 = vmatpush.bf16.msra.mxu0 %v957
    %1078 = vmatpush.bf16.msra.mxu0 %v955
    %1079 = vmatpush.bf16.msra.mxu0 %v953
    %1080 = vmatmul.bf16.gmra.mxu0 %v643
    %v1081 = vpop.f32.mrf.mxu0
    %v1082 = vadd.f32 %v1069, %v1081
    %v1083 = vpop.f32.mrf.mxu0
    %1084 = vdwg.mxu0
    %1085 = vmatpush.bf16.msra.mxu0 %v920
    %1086 = vmatpush.bf16.msra.mxu0 %v918
    %1087 = vmatpush.bf16.msra.mxu0 %v916
    %1088 = vmatpush.bf16.msra.mxu0 %v914
    %1089 = vmatpush.bf16.msra.mxu0 %v912
    %1090 = vmatpush.bf16.msra.mxu0 %v910
    %1091 = vmatpush.bf16.msra.mxu0 %v908
    %1092 = vmatpush.bf16.msra.mxu0 %v906
    %1093 = vmatmul.bf16.gmra.mxu0 %v640
    %v1094 = vpop.f32.mrf.mxu0
    %v1095 = vadd.f32 %v710, %v1094
    %v1096 = vpop.f32.mrf.mxu0
    %1097 = vdwg.mxu0
    %1098 = vmatpush.bf16.msra.mxu0 %v936
    %1099 = vmatpush.bf16.msra.mxu0 %v934
    %1100 = vmatpush.bf16.msra.mxu0 %v932
    %1101 = vmatpush.bf16.msra.mxu0 %v930
    %1102 = vmatpush.bf16.msra.mxu0 %v928
    %1103 = vmatpush.bf16.msra.mxu0 %v926
    %1104 = vmatpush.bf16.msra.mxu0 %v924
    %1105 = vmatpush.bf16.msra.mxu0 %v922
    %1106 = vmatmul.bf16.gmra.mxu0 %v641
    %v1107 = vpop.f32.mrf.mxu0
    %v1108 = vadd.f32 %v1095, %v1107
    %v1109 = vpop.f32.mrf.mxu0
    %1110 = vdwg.mxu0
    %1111 = vmatpush.bf16.msra.mxu0 %v952
    %1112 = vmatpush.bf16.msra.mxu0 %v950
    %1113 = vmatpush.bf16.msra.mxu0 %v948
    %1114 = vmatpush.bf16.msra.mxu0 %v946
    %1115 = vmatpush.bf16.msra.mxu0 %v944
    %1116 = vmatpush.bf16.msra.mxu0 %v942
    %1117 = vmatpush.bf16.msra.mxu0 %v940
    %1118 = vmatpush.bf16.msra.mxu0 %v938
    %1119 = vmatmul.bf16.gmra.mxu0 %v642
    %v1120 = vpop.f32.mrf.mxu0
    %v1121 = vadd.f32 %v1108, %v1120
    %v1122 = vpop.f32.mrf.mxu0
    %1123 = vdwg.mxu0
    %1124 = vmatpush.bf16.msra.mxu0 %v968
    %1125 = vmatpush.bf16.msra.mxu0 %v966
    %1126 = vmatpush.bf16.msra.mxu0 %v964
    %1127 = vmatpush.bf16.msra.mxu0 %v962
    %1128 = vmatpush.bf16.msra.mxu0 %v960
    %1129 = vmatpush.bf16.msra.mxu0 %v958
    %1130 = vmatpush.bf16.msra.mxu0 %v956
    %1131 = vmatpush.bf16.msra.mxu0 %v954
    %1132 = vmatmul.bf16.gmra.mxu0 %v643
    %v1133 = vpop.f32.mrf.mxu0
    %v1134 = vadd.f32 %v1121, %v1133
    %v1135 = vpop.f32.mrf.mxu0
    %1136 = vdwg.mxu0
    %v1137 = vxor.u32 %v1082, 2147483648
    %v1138 = vxor.u32 %v1134, 2147483648
    %v1139 = vmul.f32 %v1137, 1.442695
    %v1140 = vpow.pop %v1139
    %v1141 = vmul.f32 %v1138, 1.442695
    %v1142 = vpow.pop %v1141
    %v1143 = vadd.f32 %v1140, 1.0
    %v1144 = vadd.f32 %v1142, 1.0
    %v1145 = vrcp.pop %v1143
    %v1146 = vmul.f32 %v1143, %v1145
    %v1147 = vsub.f32 1.0, %v1146
    %v1148 = vmul.f32 %v1145, %v1147
    %v1149 = vadd.f32 %v1145, %v1148
    %vm1150 = vweird.f32 %v1143
    %vm1151 = vweird.f32 %v1145
    %vm1152 = vmor %vm1150, %vm1151
    %v1153 = vsel %vm1152, %v1145, %v1149
    %v1154 = vand.u32 2147483647, %v1143
    %vm1155 = vcmp.eq.f32.partialorder %v1154, 8.507059e+37
    %v1156 = vand.u32 %v1143, 2147483648
    %v1157 = vor.u32 1.1754944e-38, %v1156
    %v1158 = vsel %vm1155, %v1157, %v1153
    %v1159 = vmul.f32 1.0, %v1158
    %v1160 = vrcp.pop %v1144
    %v1161 = vmul.f32 %v1144, %v1160
    %v1162 = vsub.f32 1.0, %v1161
    %v1163 = vmul.f32 %v1160, %v1162
    %v1164 = vadd.f32 %v1160, %v1163
    %vm1165 = vweird.f32 %v1144
    %vm1166 = vweird.f32 %v1160
    %vm1167 = vmor %vm1165, %vm1166
    %v1168 = vsel %vm1167, %v1160, %v1164
    %v1169 = vand.u32 2147483647, %v1144
    %vm1170 = vcmp.eq.f32.partialorder %v1169, 8.507059e+37
    %v1171 = vand.u32 %v1144, 2147483648
    %v1172 = vor.u32 1.1754944e-38, %v1171
    %v1173 = vsel %vm1170, %v1172, %v1168
    %v1174 = vmul.f32 1.0, %v1173
    %v1175 = vld [vmem:[#allocation5 + $0xa] sm:$0x1]
    %v1176 = vpack.c.bf16 %v1159, %v1159
    %v1177 = vpack.c.bf16 %v1174, %v1174
    %v1178 = vld [vmem:[#allocation11] sm:$0xf]
    %v1179 = vld [vmem:[#allocation11 + $0x4] sm:$0xf]
    %v1180 = vld [vmem:[#allocation11 + $0x8] sm:$0xf]
    %v1181 = vld [vmem:[#allocation11 + $0xc] sm:$0xf]
    %v1182 = vld [vmem:[#allocation11 + $0x10] sm:$0xf]
    %v1183 = vld [vmem:[#allocation11 + $0x14] sm:$0xf]
    %v1184 = vld [vmem:[#allocation11 + $0x18] sm:$0xf]
    %v1185 = vld [vmem:[#allocation11 + $0x1c] sm:$0xf]
    %v1186 = vld [vmem:[#allocation11 + $0x20] sm:$0xf]
    %v1187 = vld [vmem:[#allocation11 + $0x24] sm:$0xf]
    %v1188 = vld [vmem:[#allocation11 + $0x28] sm:$0xf]
    %v1189 = vld [vmem:[#allocation11 + $0x2c] sm:$0xf]
    %v1190 = vld [vmem:[#allocation11 + $0x30] sm:$0xf]
    %v1191 = vld [vmem:[#allocation11 + $0x34] sm:$0xf]
    %v1192 = vld [vmem:[#allocation11 + $0x38] sm:$0xf]
    %v1193 = vld [vmem:[#allocation11 + $0x3c] sm:$0xf]
    %v1194 = vld [vmem:[#allocation11 + $0x40] sm:$0xf]
    %v1195 = vld [vmem:[#allocation11 + $0x44] sm:$0xf]
    %v1196 = vld [vmem:[#allocation11 + $0x48] sm:$0xf]
    %v1197 = vld [vmem:[#allocation11 + $0x4c] sm:$0xf]
    %v1198 = vld [vmem:[#allocation11 + $0x50] sm:$0xf]
    %v1199 = vld [vmem:[#allocation11 + $0x54] sm:$0xf]
    %v1200 = vld [vmem:[#allocation11 + $0x58] sm:$0xf]
    %v1201 = vld [vmem:[#allocation11 + $0x5c] sm:$0xf]
    %v1202 = vld [vmem:[#allocation11 + $0x60] sm:$0xf]
    %v1203 = vld [vmem:[#allocation11 + $0x64] sm:$0xf]
    %v1204 = vld [vmem:[#allocation11 + $0x68] sm:$0xf]
    %v1205 = vld [vmem:[#allocation11 + $0x6c] sm:$0xf]
    %v1206 = vld [vmem:[#allocation11 + $0x70] sm:$0xf]
    %v1207 = vld [vmem:[#allocation11 + $0x74] sm:$0xf]
    %v1208 = vld [vmem:[#allocation11 + $0x78] sm:$0xf]
    %v1209 = vld [vmem:[#allocation11 + $0x7c] sm:$0xf]
    %v1211 = vperm.slane %v1175, 0
    %v1245 = vunpack.c.l.b16 %v1178
    %v1246 = vunpack.c.l.b16 %v1179
    %v1247 = vunpack.c.l.b16 %v1180
    %v1248 = vunpack.c.l.b16 %v1181
    %v1249 = vunpack.c.l.b16 %v1182
    %v1250 = vunpack.c.l.b16 %v1183
    %v1251 = vunpack.c.l.b16 %v1184
    %v1252 = vunpack.c.l.b16 %v1185
    %v1253 = vunpack.c.l.b16 %v1186
    %v1254 = vunpack.c.l.b16 %v1187
    %v1255 = vunpack.c.l.b16 %v1188
    %v1256 = vunpack.c.l.b16 %v1189
    %v1257 = vunpack.c.l.b16 %v1190
    %v1258 = vunpack.c.l.b16 %v1191
    %v1259 = vunpack.c.l.b16 %v1192
    %v1260 = vunpack.c.l.b16 %v1193
    %v1261 = vunpack.c.l.b16 %v1194
    %v1262 = vunpack.c.l.b16 %v1195
    %v1263 = vunpack.c.l.b16 %v1196
    %v1264 = vunpack.c.l.b16 %v1197
    %v1265 = vunpack.c.l.b16 %v1198
    %v1266 = vunpack.c.l.b16 %v1199
    %v1267 = vunpack.c.l.b16 %v1200
    %v1268 = vunpack.c.l.b16 %v1201
    %v1269 = vunpack.c.l.b16 %v1202
    %v1270 = vunpack.c.l.b16 %v1203
    %v1271 = vunpack.c.l.b16 %v1204
    %v1272 = vunpack.c.l.b16 %v1205
    %v1273 = vunpack.c.l.b16 %v1206
    %v1274 = vunpack.c.l.b16 %v1207
    %v1275 = vunpack.c.l.b16 %v1208
    %v1276 = vunpack.c.l.b16 %v1209
    %v1277 = vpack.c.b16 %v1246, %v1245
    %v1278 = vpack.c.b16 %v1248, %v1247
    %v1279 = vpack.c.b16 %v1250, %v1249
    %v1280 = vpack.c.b16 %v1252, %v1251
    %v1281 = vpack.c.b16 %v1254, %v1253
    %v1282 = vpack.c.b16 %v1256, %v1255
    %v1283 = vpack.c.b16 %v1258, %v1257
    %v1284 = vpack.c.b16 %v1260, %v1259
    %v1285 = vpack.c.b16 %v1262, %v1261
    %v1286 = vpack.c.b16 %v1264, %v1263
    %v1287 = vpack.c.b16 %v1266, %v1265
    %v1288 = vpack.c.b16 %v1268, %v1267
    %v1289 = vpack.c.b16 %v1270, %v1269
    %v1290 = vpack.c.b16 %v1272, %v1271
    %v1291 = vpack.c.b16 %v1274, %v1273
    %v1292 = vpack.c.b16 %v1276, %v1275
    %1309 = vmatpush.bf16.msra.mxu0 %v1284
    %1310 = vmatpush.bf16.msra.mxu0 %v1283
    %1311 = vmatpush.bf16.msra.mxu0 %v1282
    %1312 = vmatpush.bf16.msra.mxu0 %v1281
    %1313 = vmatpush.bf16.msra.mxu0 %v1280
    %1314 = vmatpush.bf16.msra.mxu0 %v1279
    %1315 = vmatpush.bf16.msra.mxu0 %v1278
    %1316 = vmatpush.bf16.msra.mxu0 %v1277
    %1317 = vmatmul.bf16.gmra.mxu0 %v1176
    %v1318 = vpop.f32.mrf.mxu0
    %v1319 = vadd.f32 %v1211, %v1318
    %v1320 = vpop.f32.mrf.mxu0
    %1321 = vdwg.mxu0
    %1322 = vmatpush.bf16.msra.mxu0 %v1292
    %1323 = vmatpush.bf16.msra.mxu0 %v1291
    %1324 = vmatpush.bf16.msra.mxu0 %v1290
    %1325 = vmatpush.bf16.msra.mxu0 %v1289
    %1326 = vmatpush.bf16.msra.mxu0 %v1288
    %1327 = vmatpush.bf16.msra.mxu0 %v1287
    %1328 = vmatpush.bf16.msra.mxu0 %v1286
    %1329 = vmatpush.bf16.msra.mxu0 %v1285
    %1330 = vmatmul.bf16.gmra.mxu0 %v1177
    %v1331 = vpop.f32.mrf.mxu0
    %v1332 = vadd.f32 %v1319, %v1331
    %v1333 = vpop.f32.mrf.mxu0
    %1334 = vdwg.mxu0
    %v1335 = vadd.f32 %v1332, %v560
    %v1336 = vxor.u32 %v1335, 2147483648
    %v1337 = vmul.f32 %v1336, 1.442695
    %v1338 = vpow.pop %v1337
    %v1339 = vadd.f32 %v1338, 1.0
    %v1340 = vrcp.pop %v1339
    %v1341 = vmul.f32 %v1339, %v1340
    %v1342 = vsub.f32 1.0, %v1341
    %v1343 = vmul.f32 %v1340, %v1342
    %v1344 = vadd.f32 %v1340, %v1343
    %vm1345 = vweird.f32 %v1339
    %vm1346 = vweird.f32 %v1340
    %vm1347 = vmor %vm1345, %vm1346
    %v1348 = vsel %vm1347, %v1340, %v1344
    %v1349 = vand.u32 2147483647, %v1339
    %vm1350 = vcmp.eq.f32.partialorder %v1349, 8.507059e+37
    %v1351 = vand.u32 %v1339, 2147483648
    %v1352 = vor.u32 1.1754944e-38, %v1351
    %v1353 = vsel %vm1350, %v1352, %v1348
    %v1354 = vmul.f32 1.0, %v1353
    %v1355 = vmul.f32 %v1354, 6.2831855
    %1356 = vst [vmem:[#allocation13] sm:$0xff] %v1355
    // Predicated region
    $region50: #{tpu_custom_call.1} parent=1 // pred_check
      _
    $region51: #{tpu_custom_call.1} parent=1 // pred_check_branch
      %1358 = sbr.rel (0) target = $region53
    $region52: #{tpu_custom_call.1} parent=1 // pred_region
      %1360 = vsyncadd [#allocation4], 0
      %s1362 = sshll.u32 [#allocation13], 4
      %s1363 = int_to_ptr.vmem [resolvable:$true] %s1362
      %s1364 = sshll.u32 %s6, 4
      %s1365 = int_to_ptr.hbm [resolvable:$true] %s1364
      %1367 = dma.vmem_to_hbm [thread:$0]  %s1363, 128, %s1365, [#allocation4]
    $region53: #{tpu_custom_call.1} parent=1 // pred_fallthru
      _
    // Predicated region
    $region54: #{tpu_custom_call.1} parent=1 // pred_check
      _
    $region55: #{tpu_custom_call.1} parent=1 // pred_check_branch
      %1369 = sbr.rel (0) target = $region57
    $region56: #{tpu_custom_call.1} parent=1 // pred_region
      %1371 = dma.done [#allocation4], 128
    $region57: #{tpu_custom_call.1} parent=1 // pred_fallthru
      _
    %1372 = vsyncpa [#allocation3], 1
    %1373 = vsyncpa [#allocation6], 1
    %1374 = vsyncpa [#allocation9], 1
    %1375 = vsyncpa [#allocation12], 1
    %1376 = vsyncpa [#allocation4], 1

</llo_original>
